<compile_context>
chip_gen: v6e
topology: v6e:2x2x1
jax: 0.10.0
libtpu: 0.0.40
codegen_flags: <defaults>
</compile_context>

<pallas_src>
import functools
import math

import jax
import jax.numpy as jnp
from jax.experimental import pallas as pl
from jax.experimental.pallas import tpu as pltpu

# -log(clip(one_hot, 1e-4, 1.0)) is 0 on the hot class and -log(1e-4) elsewhere.
_NEG_LOG_1EM4 = -math.log(1e-4)


def _round_up(x, m):
    return (x + m - 1) // m * m


def _sce_kernel(pred_ref, labels_ref, out_ref, *, alpha, beta, tile_n,
                num_tiles, valid_in_last):
    """One grid step: partial sum of alpha*CE + beta*RCE over tile_n samples.

    Class-major layout: pred_ref is (C, tile_n), labels_ref is (1, tile_n).
    """
    step = pl.program_id(0)

    pred = pred_ref[...].astype(jnp.float32)        # (C, tile_n); in-kernel upcast
    labels = labels_ref[...]                        # (1, tile_n) int32
    c, tn = pred.shape

    # one-hot along the class (sublane) axis via iota compare (VPU).
    class_ids = jax.lax.broadcasted_iota(jnp.int32, (c, tn), 0)
    one_hot = (class_ids == labels).astype(jnp.float32)        # (C, tile_n)

    # ---- numerically stable softmax pieces, single exp pass ----
    col_max = jnp.max(pred, axis=0, keepdims=True)             # (1, tile_n)
    shifted = pred - col_max                                   # (C, tile_n)
    exp_shifted = jnp.exp(shifted)                             # only full-tile exp
    sum_exp = jnp.sum(exp_shifted, axis=0, keepdims=True)      # (1, tile_n)
    lse = jnp.log(sum_exp)                                     # (1, tile_n)

    # ---- cross entropy, no materialized log_softmax ----
    # -sum(one_hot * (shifted - lse)) == lse - <one_hot, shifted>
    ce_col = lse - jnp.sum(one_hot * shifted, axis=0, keepdims=True)

    # ---- reverse cross entropy, closed form ----
    # rce = -sum(sm_clipped * log(clip(one_hot,1e-4,1)))
    #     = -log(1e-4) * (sum(sm_clipped) - sm_clipped[hot])
    # exact reciprocal keeps 1e-5 agreement with the reference (approx=True
    # would cost ~1e-3 rel. error).
    inv_sum = pl.reciprocal(sum_exp, approx=False)
    sm = jnp.clip(exp_shifted * inv_sum, 1e-7, 1.0)            # clamped softmax
    sum_sm = jnp.sum(sm, axis=0, keepdims=True)
    hot_sm = jnp.sum(one_hot * sm, axis=0, keepdims=True)
    rce_col = _NEG_LOG_1EM4 * (sum_sm - hot_sm)

    per_col = alpha * ce_col + beta * rce_col                  # (1, tile_n)

    if valid_in_last == tile_n:
        # No ragged tail: every lane of every tile is valid on the fast path.
        out_ref[...] = jnp.sum(per_col).reshape(1, 1, 1)
    else:
        # Partial edge block: mask only on the last grid step (garbage lanes
        # are removed by the select, so NaN/Inf cannot leak into the sum).
        @pl.when(step == num_tiles - 1)
        def _tail():
            lane_ids = jax.lax.broadcasted_iota(jnp.int32, (1, tn), 1)
            masked = jnp.where(lane_ids < valid_in_last, per_col, 0.0)
            out_ref[...] = jnp.sum(masked).reshape(1, 1, 1)

        @pl.when(step != num_tiles - 1)
        def _full():
            out_ref[...] = jnp.sum(per_col).reshape(1, 1, 1)


def sce_loss(pred, labels, *, alpha, beta, num_classes=10, tile_n=None):
    """Pallas implementation of SCELoss.forward. pred: [N, C] float, labels: [N] int."""
    assert pred.ndim == 2 and pred.shape[1] == num_classes
    n, c = pred.shape

    # Pick the batch tile: one big lane-dense tile if the batch fits, else
    # 128-lane-aligned tiles (class-major blocks are ~640 KiB/tile at 8192).
    if tile_n is None:
        tile_n = 8192
    if tile_n >= n:
        tile_n = n
    else:
        tile_n = max(128, _round_up(tile_n, 128))
        if tile_n >= n:
            tile_n = n
    num_tiles = pl.cdiv(n, tile_n)
    valid_in_last = n - (num_tiles - 1) * tile_n

    # Class-major, lane-dense inputs (batch axis on the 128 lanes).
    pred_t = pred.T                                 # (C, N), original dtype
    labels2d = labels.reshape(1, n).astype(jnp.int32)

    partials = pl.pallas_call(
        functools.partial(
            _sce_kernel,
            alpha=float(alpha),
            beta=float(beta),
            tile_n=tile_n,
            num_tiles=num_tiles,
            valid_in_last=valid_in_last,
        ),
        out_shape=jax.ShapeDtypeStruct((num_tiles, 1, 1), jnp.float32),
        grid_spec=pltpu.PrefetchScalarGridSpec(
            num_scalar_prefetch=0,
            grid=(num_tiles,),
            in_specs=[
                pl.BlockSpec((c, tile_n), lambda i: (0, i)),   # pred tile (C-major)
                pl.BlockSpec((1, tile_n), lambda i: (0, i)),   # labels tile (lane-dense)
            ],
            out_specs=pl.BlockSpec((1, 1, 1), lambda i: (i, 0, 0)),  # per-tile partial
        ),
        compiler_params=pltpu.CompilerParams(
            dimension_semantics=("parallel",),      # independent tiles -> both TCs on v7x
        ),
    )(pred_t, labels2d)

    # Tiny cross-tile reduction + mean in plain XLA.
    return jnp.sum(partials) / n


def _sce_loss_ref(pred, labels, *, alpha, beta, num_classes=10):
    """Plain-JAX reference mirroring the PyTorch forward, for a sanity check."""
    log_sm = jax.nn.log_softmax(pred.astype(jnp.float32), axis=1)
    one_hot = jax.nn.one_hot(labels, num_classes, dtype=jnp.float32)
    ce = jnp.mean(-jnp.sum(one_hot * log_sm, axis=1))
    sm = jnp.clip(jnp.exp(log_sm), 1e-07, 1.0)
    rce = -jnp.sum(sm * jnp.log(jnp.clip(one_hot, 1e-4, 1.0)), axis=1)
    return alpha * ce + beta * jnp.mean(rce)


if __name__ == "__main__":
    key = jax.random.PRNGKey(0)
    k_pred, k_lab = jax.random.split(key)

    N, C = 8, 10            # batch=8, num_classes=10 (module default)
    ALPHA, BETA = 0.1, 1.0  # deterministic hyperparameters

    pred = jax.random.normal(k_pred, (N, C), dtype=jnp.float32)
    labels = jax.random.randint(k_lab, (N,), 0, C, dtype=jnp.int32)

    loss = sce_loss(pred, labels, alpha=ALPHA, beta=BETA, num_classes=C)
    loss = jax.block_until_ready(loss)
    ref = _sce_loss_ref(pred, labels, alpha=ALPHA, beta=BETA, num_classes=C)
    assert jnp.allclose(loss, ref, rtol=1e-5, atol=1e-5), (loss, ref)

    # Exercise the multi-tile + ragged-tail path: N=300, tile_n=128 -> 3 parallel
    # tiles, last tile has 44 valid lanes (no host-side pad, in-kernel mask).
    N2 = 300
    pred2 = jax.random.normal(jax.random.PRNGKey(1), (N2, C), dtype=jnp.float32)
    labels2 = jax.random.randint(jax.random.PRNGKey(2), (N2,), 0, C, dtype=jnp.int32)
    loss2 = jax.block_until_ready(
        sce_loss(pred2, labels2, alpha=ALPHA, beta=BETA, num_classes=C, tile_n=128))
    ref2 = _sce_loss_ref(pred2, labels2, alpha=ALPHA, beta=BETA, num_classes=C)
    assert jnp.allclose(loss2, ref2, rtol=1e-5, atol=1e-5), (loss2, ref2)

    print("KERNEL_OK")
</pallas_src>

<mosaic_0001>
module attributes {stable_mosaic.version = 11 : i64} {
  func.func @_sce_kernel(%arg0: i32, %arg1: memref<10x8xf32, #tpu.memory_space<vmem>>, %arg2: memref<1x8xi32, #tpu.memory_space<vmem>>, %arg3: memref<1x1x1xf32, #tpu.memory_space<vmem>>) attributes {dimension_semantics = [#tpu.dimension_semantics<parallel>], iteration_bounds = array<i64: 1>, scalar_prefetch = 0 : i64, scratch_operands = 0 : i64, tpu.core_type = #tpu.core_type<tc>, window_params = [{transform_indices = @transform_0, window_bounds = array<i64: 10, 8>}, {transform_indices = @transform_1, window_bounds = array<i64: 1, 8>}, {transform_indices = @transform_2, window_bounds = array<i64: 1, 1, 1>}]} {
    %c0 = arith.constant 0 : index
    %c0_0 = arith.constant 0 : index
    %0 = vector.load %arg1[%c0, %c0_0] : memref<10x8xf32, #tpu.memory_space<vmem>>, vector<10x8xf32>
    %c0_1 = arith.constant 0 : index
    %c0_2 = arith.constant 0 : index
    %1 = vector.load %arg2[%c0_1, %c0_2] : memref<1x8xi32, #tpu.memory_space<vmem>>, vector<1x8xi32>
    %2 = tpu.iota {dimensions = array<i32: 0>} : vector<10x8xi32>
    %3 = vector.broadcast %1 : vector<1x8xi32> to vector<10x8xi32>
    %4 = arith.cmpi eq, %2, %3 : vector<10x8xi32>
    %5 = arith.extui %4 : vector<10x8xi1> to vector<10x8xi32>
    %6 = arith.sitofp %5 : vector<10x8xi32> to vector<10x8xf32>
    %cst = arith.constant dense<0xFF800000> : vector<8xf32>
    %7 = vector.multi_reduction <maximumf>, %0, %cst [0] : vector<10x8xf32> to vector<8xf32>
    %8 = vector.shape_cast %7 : vector<8xf32> to vector<1x8xf32>
    %9 = vector.broadcast %8 : vector<1x8xf32> to vector<10x8xf32>
    %10 = arith.subf %0, %9 : vector<10x8xf32>
    %11 = math.exp %10 : vector<10x8xf32>
    %cst_3 = arith.constant dense<0.000000e+00> : vector<8xf32>
    %12 = vector.multi_reduction <add>, %11, %cst_3 [0] : vector<10x8xf32> to vector<8xf32>
    %13 = vector.shape_cast %12 : vector<8xf32> to vector<1x8xf32>
    %14 = math.log %13 : vector<1x8xf32>
    %15 = arith.mulf %6, %10 : vector<10x8xf32>
    %cst_4 = arith.constant dense<0.000000e+00> : vector<8xf32>
    %16 = vector.multi_reduction <add>, %15, %cst_4 [0] : vector<10x8xf32> to vector<8xf32>
    %17 = vector.shape_cast %16 : vector<8xf32> to vector<1x8xf32>
    %18 = arith.subf %14, %17 : vector<1x8xf32>
    %19 = tpu.reciprocal %13 : vector<1x8xf32> -> vector<1x8xf32>
    %20 = vector.broadcast %19 : vector<1x8xf32> to vector<10x8xf32>
    %21 = arith.mulf %11, %20 : vector<10x8xf32>
    %cst_5 = arith.constant 1.000000e-07 : f32
    %cst_6 = arith.constant 1.000000e+00 : f32
    %22 = vector.broadcast %cst_5 : f32 to vector<10x8xf32>
    %23 = arith.maximumf %22, %21 : vector<10x8xf32>
    %24 = vector.broadcast %cst_6 : f32 to vector<10x8xf32>
    %25 = arith.minimumf %24, %23 : vector<10x8xf32>
    %cst_7 = arith.constant dense<0.000000e+00> : vector<8xf32>
    %26 = vector.multi_reduction <add>, %25, %cst_7 [0] : vector<10x8xf32> to vector<8xf32>
    %27 = vector.shape_cast %26 : vector<8xf32> to vector<1x8xf32>
    %28 = arith.mulf %6, %25 : vector<10x8xf32>
    %cst_8 = arith.constant dense<0.000000e+00> : vector<8xf32>
    %29 = vector.multi_reduction <add>, %28, %cst_8 [0] : vector<10x8xf32> to vector<8xf32>
    %30 = vector.shape_cast %29 : vector<8xf32> to vector<1x8xf32>
    %31 = arith.subf %27, %30 : vector<1x8xf32>
    %cst_9 = arith.constant 9.21034049 : f32
    %32 = vector.broadcast %cst_9 : f32 to vector<1x8xf32>
    %33 = arith.mulf %32, %31 : vector<1x8xf32>
    %cst_10 = arith.constant 1.000000e-01 : f32
    %34 = vector.broadcast %cst_10 : f32 to vector<1x8xf32>
    %35 = arith.mulf %34, %18 : vector<1x8xf32>
    %cst_11 = arith.constant 1.000000e+00 : f32
    %36 = vector.broadcast %cst_11 : f32 to vector<1x8xf32>
    %37 = arith.mulf %36, %33 : vector<1x8xf32>
    %38 = arith.addf %35, %37 : vector<1x8xf32>
    %39 = vector.shape_cast %38 : vector<1x8xf32> to vector<1x1x8xf32>
    %cst_12 = arith.constant dense<0.000000e+00> : vector<1xf32>
    %40 = vector.multi_reduction <add>, %39, %cst_12 [1, 2] : vector<1x1x8xf32> to vector<1xf32>
    %41 = vector.shape_cast %40 : vector<1xf32> to vector<1x1x1xf32>
    %42 = vector.extract %41[0, 0, 0] : f32 from vector<1x1x1xf32>
    %43 = vector.broadcast %42 : f32 to vector<1x1x1xf32>
    %c0_13 = arith.constant 0 : index
    %c0_14 = arith.constant 0 : index
    %c0_15 = arith.constant 0 : index
    %44 = vector.load %arg3[%c0_13, %c0_14, %c0_15] : memref<1x1x1xf32, #tpu.memory_space<vmem>>, vector<1x1x1xf32>
    tpu.vector_store %arg3[%c0_13, %c0_14, %c0_15], %43 {strides = array<i32>} : memref<1x1x1xf32, #tpu.memory_space<vmem>>, vector<1x1x1xf32>,
    return
  }
  func.func @transform_0(%arg0: i32) -> (i32, i32) {
    %c0_i32 = arith.constant 0 : i32
    %c0_i32_0 = arith.constant 0 : i32
    return %c0_i32, %arg0 : i32, i32
  }
  func.func @transform_1(%arg0: i32) -> (i32, i32) {
    %c0_i32 = arith.constant 0 : i32
    %c0_i32_0 = arith.constant 0 : i32
    return %c0_i32, %arg0 : i32, i32
  }
  func.func @transform_2(%arg0: i32) -> (i32, i32, i32) {
    %c0_i32 = arith.constant 0 : i32
    %c0_i32_0 = arith.constant 0 : i32
    %c0_i32_1 = arith.constant 0 : i32
    return %arg0, %c0_i32, %c0_i32_0 : i32, i32, i32
  }
}

</mosaic_0001>

<llo_original>
// kernel: tpu_custom_call.1
$region0: #{tpu_custom_call.1}
  #allocation0 [shape = 'u32[]', space=smem, size = 0x4, offset = 0x4, fixed_abs, tag = 'smem constant byte address 0x4 - core index']
  #allocation1 [shape = 'u32[144,128]{1,0:T(1,128)}', space=vmem, size = 0x12000, scoped, tag = 'internal scratch']
  %s0 = inlined_call_operand.vmem [shape: f32[10,8], index: 0, kind: input, shape index: {}]
  %s1 = inlined_call_operand.vmem [shape: s32[1,8], index: 1, kind: input, shape index: {}]
  %s2 = inlined_call_operand.hbm [shape: f32[1,1,1], index: 2, kind: output, shape index: {}]
  %s3 = sld [smem:[#allocation0]]
  $region18: #{tpu_custom_call.1} parent=0
    _
  %s5 = ssub.s32 1, %s3
  %s6 = scalar_select 0, %s5, %s3
  $region1: #{tpu_custom_call.1} parent=0
    #allocation2 [shape = 'u8[512]{0}', space=vmem, size = 0x400, scoped, tag = 'output window, operand 0, single buffered']
    #allocation3 [shape = 's32[1]{0}', space=sflag, size = 0x4, scoped, tag = 'scoped memory for tpu_custom_call.1']
    %7 = vsyncpa [#allocation3], 0
    // Predicated region
    $region2: #{tpu_custom_call.1} parent=1 // pred_check
      _
    $region3: #{tpu_custom_call.1} parent=1 // pred_check_branch
      %9 = sbr.rel (0) target = $region5
    $region4: #{tpu_custom_call.1} parent=1 // pred_region
      _
    $region5: #{tpu_custom_call.1} parent=1 // pred_fallthru
      _
    // Predicated region
    $region6: #{tpu_custom_call.1} parent=1 // pred_check
      _
    $region7: #{tpu_custom_call.1} parent=1 // pred_check_branch
      %11 = sbr.rel (0) target = $region9
    $region8: #{tpu_custom_call.1} parent=1 // pred_region
      _
    $region9: #{tpu_custom_call.1} parent=1 // pred_fallthru
      _
    %v12 = vld [vmem:[%s0] sm:$0xff]
    %v13 = vld [vmem:[%s0 + $0x8] sm:$0x3]
    %v14 = vld [vmem:[%s1] sm:$0x1]
    %v15 = vlaneseq
    %v16 = vshrl.u32 %v15, 7
    %v17 = vadd.s32 %v16, 8
    %v18 = vlaneseq
    %v19 = vshrl.u32 %v18, 7
    %v20 = vsub.s32 0, %v19
    %v21 = vrot.slane %v14, %v20
    %vm22 = vcmp.eq.s32.totalorder %v16, %v21
    %vm23 = vcmp.eq.s32.totalorder %v17, %v21
    %v24 = vsel %vm22, 1, 0
    %v25 = vsel %vm23, 1, 0
    %v26 = vcvt.s32.f32 %v24
    %v27 = vcvt.s32.f32 %v25
    %vm28 = vcmask 64512
    %v29 = vsel %vm28, %v12, -inf
    %vm30 = vcmask 58368
    %v31 = vsel %vm30, %v13, -inf
    %v32 = vmax.f32 %v29, %v31
    %v33 = vrot.slane %v32, 4
    %v34 = vmax.f32 %v32, %v33
    %v35 = vrot.slane %v34, 2
    %v36 = vmax.f32 %v34, %v35
    %v37 = vrot.slane %v36, 1
    %v38 = vmax.f32 %v36, %v37
    %v39 = vsub.f32 %v12, %v38
    %v40 = vsub.f32 %v13, %v38
    %v41 = vmul.f32 %v39, 1.442695
    %v42 = vpow.pop %v41
    %v43 = vmul.f32 %v40, 1.442695
    %v44 = vpow.pop %v43
    %v45 = vsel %vm28, %v42, 0.0
    %v46 = vsel %vm30, %v44, 0.0
    %v47 = vadd.f32 %v45, %v46
    %v48 = vrot.slane %v47, 4
    %v49 = vadd.f32 %v47, %v48
    %v50 = vrot.slane %v49, 2
    %v51 = vadd.f32 %v49, %v50
    %v52 = vrot.slane %v51, 1
    %v53 = vadd.f32 %v51, %v52
    %v54 = vlog2.pop %v53
    %v55 = vmul.f32 %v54, 0.6931472
    %v56 = vmul.f32 %v26, %v39
    %v57 = vmul.f32 %v27, %v40
    %v58 = vsel %vm28, %v56, 0.0
    %v59 = vsel %vm30, %v57, 0.0
    %v60 = vadd.f32 %v58, %v59
    %v61 = vrot.slane %v60, 4
    %v62 = vadd.f32 %v60, %v61
    %v63 = vrot.slane %v62, 2
    %v64 = vadd.f32 %v62, %v63
    %v65 = vrot.slane %v64, 1
    %v66 = vadd.f32 %v64, %v65
    %v67 = vsub.f32 %v55, %v66
    %v68 = vrcp.pop %v53
    %v69 = vmul.f32 %v42, %v68
    %v70 = vmul.f32 %v44, %v68
    %v71 = vmax.f32 %v69, 1e-07
    %v72 = vmax.f32 %v70, 1e-07
    %v73 = vmin.f32 %v71, 1.0
    %v74 = vmin.f32 %v72, 1.0
    %v75 = vsel %vm28, %v73, 0.0
    %v76 = vsel %vm30, %v74, 0.0
    %v77 = vadd.f32 %v75, %v76
    %v78 = vrot.slane %v77, 4
    %v79 = vadd.f32 %v77, %v78
    %v80 = vrot.slane %v79, 2
    %v81 = vadd.f32 %v79, %v80
    %v82 = vrot.slane %v81, 1
    %v83 = vadd.f32 %v81, %v82
    %v84 = vmul.f32 %v26, %v73
    %v85 = vmul.f32 %v27, %v74
    %v86 = vsel %vm28, %v84, 0.0
    %v87 = vsel %vm30, %v85, 0.0
    %v88 = vadd.f32 %v86, %v87
    %v89 = vrot.slane %v88, 4
    %v90 = vadd.f32 %v88, %v89
    %v91 = vrot.slane %v90, 2
    %v92 = vadd.f32 %v90, %v91
    %v93 = vrot.slane %v92, 1
    %v94 = vadd.f32 %v92, %v93
    %v95 = vsub.f32 %v83, %v94
    %v96 = vmul.f32 %v95, 9.2103405
    %v97 = vmul.f32 %v67, 0.1
    %v98 = vadd.f32 %v97, %v96
    %vm99 = vcmask 57344
    %v100 = vsel %vm99, %v98, 0.0
    %101 = vadd.xlane.f32.xlu0 %v100
    %v102 = vpop.xlane.xlu0 %101
    %v103 = vrot.slane %v102, 4
    %v104 = vadd.f32 %v102, %v103
    %v105 = vrot.slane %v104, 2
    %v106 = vadd.f32 %v104, %v105
    %v107 = vrot.slane %v106, 1
    %v108 = vadd.f32 %v106, %v107
    %s109 = vtos %v108
    %v110 = vstv %s109
    %vm111 = vcmask 0
    %112 = vst.msk [vmem:[#allocation2] sm:$0x1] %vm111, %v110
    // Predicated region
    $region10: #{tpu_custom_call.1} parent=1 // pred_check
      _
    $region11: #{tpu_custom_call.1} parent=1 // pred_check_branch
      %114 = sbr.rel (0) target = $region13
    $region12: #{tpu_custom_call.1} parent=1 // pred_region
      %s116 = ssub.s32 16, 16
      %117 = vsyncadd [#allocation3], %s116
      %s119 = sshll.u32 [#allocation2], 4
      %s120 = int_to_ptr.vmem [resolvable:$true] %s119
      %122 = dma.vmem_to_hbm [thread:$0]  %s120, 16, %s2, [#allocation3]
    $region13: #{tpu_custom_call.1} parent=1 // pred_fallthru
      _
    // Predicated region
    $region14: #{tpu_custom_call.1} parent=1 // pred_check
      _
    $region15: #{tpu_custom_call.1} parent=1 // pred_check_branch
      %124 = sbr.rel (0) target = $region17
    $region16: #{tpu_custom_call.1} parent=1 // pred_region
      %125 = dma.done [#allocation3], 16
    $region17: #{tpu_custom_call.1} parent=1 // pred_fallthru
      _
    %126 = vsyncpa [#allocation3], 1

</llo_original>
